<compile_context>
chip_gen: v5e
topology: v5e:2x2
jax: 0.10.0
libtpu: 0.0.40
codegen_flags: <defaults>
</compile_context>

<pallas_src>
import functools

import jax
import jax.numpy as jnp
from jax.experimental import pallas as pl
from jax.experimental.pallas import tpu as pltpu

_LANE = 128
_SUBLANE = 8
_MAX_ROW_TILE = 2048            # bounds lane-padded (tc,1) param VMEM cost
_SPLIT_MIN_BYTES = 256 * 1024   # only force >=2 grid steps above this size
_DEFAULT_TILE_BYTES = 3 << 20   # ~3 MiB per big f32 stream per tile


def _round_down(v, m):
    return (v // m) * m


def _round_up(v, m):
    return -(-v // m) * m


# ----------------------------------------------------------------------------
# Pallas kernel: elementwise quantize/dequantize hot path.
# ----------------------------------------------------------------------------
def _adaround_kernel(x_ref, alpha_ref, delta_ref, zp_ref, o_ref, *,
                     soft_targets: bool, n_levels: int,
                     gamma: float, zeta: float):
    x = x_ref[...]                     # (tc, tf)
    alpha = alpha_ref[...]             # (tc, tf)
    delta = delta_ref[...]             # (tc, 1)  broadcasts over lanes
    zp = zp_ref[...]                   # (tc, 1)

    # Exact divide preserves PyTorch floor(x / delta) bit-for-bit; kernel is
    # HBM-bound so the extra VALU work is hidden under DMA.
    x_floor = jnp.floor(x / delta)

    if soft_targets:
        h = jnp.clip(jax.nn.sigmoid(alpha) * (zeta - gamma) + gamma, 0.0, 1.0)
    else:
        # Single select (no bool->float cast); alpha == 0 -> h = 1, as in torch.
        h = jnp.where(alpha >= 0.0, jnp.float32(1.0), jnp.float32(0.0))

    x_quant = jnp.clip(x_floor + h + zp, 0.0, float(n_levels - 1))
    o_ref[...] = ((x_quant - zp) * delta).astype(o_ref.dtype)


# ----------------------------------------------------------------------------
# Tuning helpers.
# ----------------------------------------------------------------------------
def _auto_tuning():
    """Pick (target_tile_bytes, vmem_limit_bytes) from the local chip."""
    try:
        vmem_cap = int(pltpu.get_tpu_info().vmem_capacity_bytes)
    except Exception:
        vmem_cap = 64 << 20          # conservative: assume v7x (64 MiB per TC)
    # 3 big f32 streams (x, alpha, out) x 2 buffers at 3 MiB ~ 18 MiB, plus a
    # few MiB of lane-padded (tc,1) param blocks; keep the explicit limit well
    # under physical VMEM (v7x: 64 MiB, v5e/v6e: 128 MiB).
    target_tile_bytes = _DEFAULT_TILE_BYTES
    vmem_limit = min(48 << 20, int(vmem_cap * 0.7))
    return target_tile_bytes, vmem_limit


def _pick_tiles(C, F, itemsize, target_tile_bytes):
    """Choose (tc, tf) block shape for the (C, F) big streams."""
    # Feature-axis tile: only tileable when F is a multiple of 128; otherwise a
    # full-extent feature block is the only legal (and cheapest) choice.
    if F % _LANE == 0 and F > _LANE:
        tf = _round_down(max(target_tile_bytes // (_SUBLANE * itemsize), _LANE),
                         _LANE)
        tf = max(_LANE, min(tf, F))
    else:
        tf = F
    # Row-axis tile from the remaining per-stream budget.
    row_bytes = max(tf * itemsize, 1)
    tc = _round_down(max(target_tile_bytes // row_bytes, _SUBLANE), _SUBLANE)
    tc = max(_SUBLANE, min(tc, _MAX_ROW_TILE))
    if tc >= C:
        tc = C                         # full-extent block is always legal
    # Guarantee >= 2 grid steps on layers big enough to care, so the
    # "parallel" axes shard across v7x's two TensorCores and the DMA/compute
    # pipeline has something to overlap (harmless no-op on v5e/v6e).
    if (tc >= C and tf >= F and C >= 2 * _SUBLANE
            and C * F * itemsize >= _SPLIT_MIN_BYTES):
        tc = min(C, _round_up(-(-C // 2), _SUBLANE))
    return tc, tf


# ----------------------------------------------------------------------------
# Forward wrapper.
# ----------------------------------------------------------------------------
def adaround_forward(x, alpha, delta_c, zp_c, *,
                     soft_targets: bool, n_levels: int,
                     gamma: float = -0.1, zeta: float = 1.1,
                     target_tile_bytes=None, vmem_limit_bytes=None):
    """AdaRound forward (learned_hard_sigmoid) with the Pallas kernel.

    x, alpha     : (C, ...) float32 weight / rounding-logit tensors
    delta_c, zp_c: (C,) float32 per-output-channel quant params (delta > 0)
    """
    C = x.shape[0]
    F = int(x.size // C)
    dtype = x.dtype
    itemsize = dtype.itemsize

    if target_tile_bytes is None or vmem_limit_bytes is None:
        auto_tile, auto_limit = _auto_tuning()
        if target_tile_bytes is None:
            target_tile_bytes = auto_tile
        if vmem_limit_bytes is None:
            vmem_limit_bytes = auto_limit

    x2d = x.reshape(C, F)
    a2d = alpha.reshape(C, F)
    d2d = delta_c.reshape(C, 1).astype(dtype)
    z2d = zp_c.reshape(C, 1).astype(dtype)

    # Rare fallback: F not lane-aligned AND so wide that even an 8-row full-F
    # tile blows the VMEM budget -> pad only the feature axis up to the next
    # multiple of 128 so the lane axis can be tiled.  Per-channel delta/zp stay
    # (C,1) (no broadcast traffic); pad values are sliced off the output.
    pad_f = 0
    if F % _LANE != 0 and _SUBLANE * F * itemsize > 4 * target_tile_bytes:
        pad_f = _round_up(F, _LANE) - F
        x2d = jnp.pad(x2d, ((0, 0), (0, pad_f)))
        a2d = jnp.pad(a2d, ((0, 0), (0, pad_f)))

    Fk = F + pad_f
    tc, tf = _pick_tiles(C, Fk, itemsize, target_tile_bytes)
    grid = (pl.cdiv(C, tc), pl.cdiv(Fk, tf))

    kernel = functools.partial(
        _adaround_kernel, soft_targets=soft_targets, n_levels=n_levels,
        gamma=gamma, zeta=zeta)

    big_spec = pl.BlockSpec((tc, tf), lambda i, j: (i, j))
    prm_spec = pl.BlockSpec((tc, 1), lambda i, j: (i, 0))

    out2d = pl.pallas_call(
        kernel,
        out_shape=jax.ShapeDtypeStruct((C, Fk), dtype),
        grid=grid,
        in_specs=[big_spec, big_spec, prm_spec, prm_spec],
        out_specs=big_spec,
        compiler_params=pltpu.CompilerParams(
            dimension_semantics=("parallel", "parallel"),
            vmem_limit_bytes=int(vmem_limit_bytes)),
    )(x2d, a2d, d2d, z2d)

    if pad_f:
        out2d = out2d[:, :F]
    return out2d.reshape(x.shape)


# ----------------------------------------------------------------------------
# Plain-JAX setup glue (mirrors the PyTorch __init__ path: channel-wise 'max'
# scale init + AdaRoundQuantizer.init_alpha).  Not the forward hot path.
# ----------------------------------------------------------------------------
def init_uaq_channelwise_max(w, n_bits: int):
    n_levels = 2 ** n_bits
    C = w.shape[0]
    w2d = w.reshape(C, -1)
    x_min = jnp.minimum(jnp.min(w2d, axis=1), 0.0)
    x_max = jnp.maximum(jnp.max(w2d, axis=1), 0.0)
    delta = (x_max - x_min) / float(n_levels - 1)
    delta = jnp.where(delta < 1e-8, 1e-8, delta)
    zero_point = jnp.round(-x_min / delta)
    return delta.astype(jnp.float32), zero_point.astype(jnp.float32)


def init_alpha(w, delta_c, gamma=-0.1, zeta=1.1):
    C = w.shape[0]
    delta_b = delta_c.reshape((C,) + (1,) * (w.ndim - 1))
    x_over_d = w / delta_b
    rest = x_over_d - jnp.floor(x_over_d)
    alpha = -jnp.log((zeta - gamma) / (rest - gamma) - 1.0)
    return alpha.astype(jnp.float32)


# ----------------------------------------------------------------------------
# Pure-JAX reference (same math, no Pallas).
# ----------------------------------------------------------------------------
def reference_forward(w, alpha, delta_c, zp_c, soft_targets, n_levels,
                      gamma=-0.1, zeta=1.1):
    C = w.shape[0]
    d = delta_c.reshape((C,) + (1,) * (w.ndim - 1))
    z = zp_c.reshape((C,) + (1,) * (w.ndim - 1))
    x_floor = jnp.floor(w / d)
    if soft_targets:
        h = jnp.clip(jax.nn.sigmoid(alpha) * (zeta - gamma) + gamma, 0.0, 1.0)
    else:
        h = (alpha >= 0.0).astype(w.dtype)
    x_quant = jnp.clip(x_floor + h + z, 0.0, float(n_levels - 1))
    return (x_quant - z) * d


if __name__ == "__main__":
    n_bits = 4
    n_levels = 2 ** n_bits
    gamma, zeta = -0.1, 1.1

    def run_case(shape, key, target_tile_bytes=None):
        w = jax.random.normal(key, shape, dtype=jnp.float32) * 0.5
        delta_c, zp_c = init_uaq_channelwise_max(w, n_bits)
        alpha = init_alpha(w, delta_c, gamma, zeta)
        for soft in (False, True):
            out = adaround_forward(
                w, alpha, delta_c, zp_c, soft_targets=soft,
                n_levels=n_levels, gamma=gamma, zeta=zeta,
                target_tile_bytes=target_tile_bytes)
            jax.block_until_ready(out)
            ref = reference_forward(w, alpha, delta_c, zp_c, soft, n_levels,
                                    gamma, zeta)
            assert out.shape == w.shape
            assert jnp.allclose(out, ref, atol=1e-6, rtol=1e-6), (shape, soft)

    keys = jax.random.split(jax.random.PRNGKey(0), 6)

    # Main demo: PyTorch-style conv weight (C_out, C_in, K, K); F=36 is not a
    # multiple of 128 -> full-extent feature block, single tile, defaults.
    run_case((8, 4, 3, 3), keys[0])

    # F=128 (lane-aligned); tiny forced tile -> 3 row steps with a partial last
    # row tile (20 rows, tc=8): exercises the pipelined row path.
    run_case((20, 8, 4, 4), keys[1], target_tile_bytes=8 * 128 * 4)

    # F=240 (non-aligned), forced small tiles -> 4 row steps with full-extent
    # feature blocks (no repack, no broadcast of delta/zp).
    run_case((32, 16, 5, 3), keys[2], target_tile_bytes=8 * 240 * 4)

    # F=512 (lane-aligned, wide), forced small tiles -> 2-D grid (2 x 4):
    # exercises feature-axis tiling.
    run_case((16, 2, 16, 16), keys[3], target_tile_bytes=8 * 128 * 4)

    # F=324 (non-aligned) with a tiny budget -> rare pad-to-128 fallback path
    # (feature axis padded to 384 and tiled; output sliced back).
    run_case((8, 4, 9, 9), keys[4], target_tile_bytes=1024)

    # Medium layer at default tuning -> force-split kicks in: >=2 row steps so
    # both v7x TensorCores get work even though one tile would fit.
    run_case((128, 4, 16, 16), keys[5])

    print("KERNEL_OK")
</pallas_src>

<mosaic_0001>
module attributes {stable_mosaic.version = 11 : i64} {
  func.func @_adaround_kernel(%arg0: i32, %arg1: i32, %arg2: memref<8x36xf32, #tpu.memory_space<vmem>>, %arg3: memref<8x36xf32, #tpu.memory_space<vmem>>, %arg4: memref<8x1xf32, #tpu.memory_space<vmem>>, %arg5: memref<8x1xf32, #tpu.memory_space<vmem>>, %arg6: memref<8x36xf32, #tpu.memory_space<vmem>>) attributes {dimension_semantics = [#tpu.dimension_semantics<parallel>, #tpu.dimension_semantics<parallel>], iteration_bounds = array<i64: 1, 1>, scalar_prefetch = 0 : i64, scratch_operands = 0 : i64, tpu.core_type = #tpu.core_type<tc>, window_params = [{transform_indices = @transform_0, window_bounds = array<i64: 8, 36>}, {transform_indices = @transform_1, window_bounds = array<i64: 8, 36>}, {transform_indices = @transform_2, window_bounds = array<i64: 8, 1>}, {transform_indices = @transform_3, window_bounds = array<i64: 8, 1>}, {transform_indices = @transform_4, window_bounds = array<i64: 8, 36>}]} {
    %c0 = arith.constant 0 : index
    %c0_0 = arith.constant 0 : index
    %0 = vector.load %arg2[%c0, %c0_0] : memref<8x36xf32, #tpu.memory_space<vmem>>, vector<8x36xf32>
    %c0_1 = arith.constant 0 : index
    %c0_2 = arith.constant 0 : index
    %1 = vector.load %arg3[%c0_1, %c0_2] : memref<8x36xf32, #tpu.memory_space<vmem>>, vector<8x36xf32>
    %c0_3 = arith.constant 0 : index
    %c0_4 = arith.constant 0 : index
    %2 = vector.load %arg4[%c0_3, %c0_4] : memref<8x1xf32, #tpu.memory_space<vmem>>, vector<8x1xf32>
    %c0_5 = arith.constant 0 : index
    %c0_6 = arith.constant 0 : index
    %3 = vector.load %arg5[%c0_5, %c0_6] : memref<8x1xf32, #tpu.memory_space<vmem>>, vector<8x1xf32>
    %4 = vector.broadcast %2 : vector<8x1xf32> to vector<8x36xf32>
    %5 = arith.divf %0, %4 : vector<8x36xf32>
    %6 = math.floor %5 : vector<8x36xf32>
    %cst = arith.constant 0.000000e+00 : f32
    %7 = vector.broadcast %cst : f32 to vector<8x36xf32>
    %8 = arith.cmpf oge, %1, %7 : vector<8x36xf32>
    %cst_7 = arith.constant 1.000000e+00 : f32
    %cst_8 = arith.constant 0.000000e+00 : f32
    %9 = vector.broadcast %cst_7 : f32 to vector<8x36xf32>
    %10 = vector.broadcast %cst_8 : f32 to vector<8x36xf32>
    %11 = arith.select %8, %9, %10 : vector<8x36xi1>, vector<8x36xf32>
    %12 = arith.addf %6, %11 : vector<8x36xf32>
    %13 = vector.broadcast %3 : vector<8x1xf32> to vector<8x36xf32>
    %14 = arith.addf %12, %13 : vector<8x36xf32>
    %cst_9 = arith.constant 0.000000e+00 : f32
    %cst_10 = arith.constant 1.500000e+01 : f32
    %15 = vector.broadcast %cst_9 : f32 to vector<8x36xf32>
    %16 = arith.maximumf %15, %14 : vector<8x36xf32>
    %17 = vector.broadcast %cst_10 : f32 to vector<8x36xf32>
    %18 = arith.minimumf %17, %16 : vector<8x36xf32>
    %19 = vector.broadcast %3 : vector<8x1xf32> to vector<8x36xf32>
    %20 = arith.subf %18, %19 : vector<8x36xf32>
    %21 = vector.broadcast %2 : vector<8x1xf32> to vector<8x36xf32>
    %22 = arith.mulf %20, %21 : vector<8x36xf32>
    %c0_11 = arith.constant 0 : index
    %c0_12 = arith.constant 0 : index
    %23 = vector.load %arg6[%c0_11, %c0_12] : memref<8x36xf32, #tpu.memory_space<vmem>>, vector<8x36xf32>
    tpu.vector_store %arg6[%c0_11, %c0_12], %22 {strides = array<i32>} : memref<8x36xf32, #tpu.memory_space<vmem>>, vector<8x36xf32>,
    return
  }
  func.func @transform_0(%arg0: i32, %arg1: i32) -> (i32, i32) {
    %c0_i32 = arith.constant 0 : i32
    return %arg0, %arg1 : i32, i32
  }
  func.func @transform_1(%arg0: i32, %arg1: i32) -> (i32, i32) {
    %c0_i32 = arith.constant 0 : i32
    return %arg0, %arg1 : i32, i32
  }
  func.func @transform_2(%arg0: i32, %arg1: i32) -> (i32, i32) {
    %c0_i32 = arith.constant 0 : i32
    %c0_i32_0 = arith.constant 0 : i32
    return %arg0, %c0_i32 : i32, i32
  }
  func.func @transform_3(%arg0: i32, %arg1: i32) -> (i32, i32) {
    %c0_i32 = arith.constant 0 : i32
    %c0_i32_0 = arith.constant 0 : i32
    return %arg0, %c0_i32 : i32, i32
  }
  func.func @transform_4(%arg0: i32, %arg1: i32) -> (i32, i32) {
    %c0_i32 = arith.constant 0 : i32
    return %arg0, %arg1 : i32, i32
  }
}

</mosaic_0001>

<llo_original>
// kernel: tpu_custom_call.1
$region0: #{tpu_custom_call.1}
  #allocation0 [shape = 'u32[]', space=smem, size = 0x4, offset = 0x4, fixed_abs, tag = 'smem constant byte address 0x4 - core index']
  #allocation1 [shape = 'u32[72,128]{1,0:T(1,128)}', space=vmem, size = 0x9000, scoped, tag = 'internal scratch']
  %s0 = inlined_call_operand.vmem [shape: f32[8,36], index: 0, kind: input, shape index: {}]
  %s1 = inlined_call_operand.vmem [shape: f32[8,36], index: 1, kind: input, shape index: {}]
  %s2 = inlined_call_operand.vmem [shape: f32[8,1], index: 2, kind: input, shape index: {}]
  %s3 = inlined_call_operand.vmem [shape: f32[8,1], index: 3, kind: input, shape index: {}]
  %s4 = inlined_call_operand.hbm [shape: f32[8,36], index: 4, kind: output, shape index: {}]
  %s5 = sld [smem:[#allocation0]]
  $region26: #{tpu_custom_call.1} parent=0
    _
  %s7 = ssub.s32 1, %s5
  %s8 = scalar_select 0, %s7, %s5
  $region1: #{tpu_custom_call.1} parent=0
    #allocation2 [shape = 'u8[4096]{0}', space=vmem, size = 0x1000, scoped, tag = 'output window, operand 0, single buffered']
    #allocation3 [shape = 's32[1]{0}', space=sflag, size = 0x4, scoped, tag = 'scoped memory for tpu_custom_call.1']
    %9 = vsyncpa [#allocation3], 0
    // Predicated region
    $region2: #{tpu_custom_call.1} parent=1 // pred_check
      _
    $region3: #{tpu_custom_call.1} parent=1 // pred_check_branch
      %11 = sbr.rel (0) target = $region5
    $region4: #{tpu_custom_call.1} parent=1 // pred_region
      _
    $region5: #{tpu_custom_call.1} parent=1 // pred_fallthru
      _
    // Predicated region
    $region6: #{tpu_custom_call.1} parent=1 // pred_check
      _
    $region7: #{tpu_custom_call.1} parent=1 // pred_check_branch
      %13 = sbr.rel (0) target = $region9
    $region8: #{tpu_custom_call.1} parent=1 // pred_region
      _
    $region9: #{tpu_custom_call.1} parent=1 // pred_fallthru
      _
    // Predicated region
    $region10: #{tpu_custom_call.1} parent=1 // pred_check
      _
    $region11: #{tpu_custom_call.1} parent=1 // pred_check_branch
      %15 = sbr.rel (0) target = $region13
    $region12: #{tpu_custom_call.1} parent=1 // pred_region
      _
    $region13: #{tpu_custom_call.1} parent=1 // pred_fallthru
      _
    // Predicated region
    $region14: #{tpu_custom_call.1} parent=1 // pred_check
      _
    $region15: #{tpu_custom_call.1} parent=1 // pred_check_branch
      %17 = sbr.rel (0) target = $region17
    $region16: #{tpu_custom_call.1} parent=1 // pred_region
      _
    $region17: #{tpu_custom_call.1} parent=1 // pred_fallthru
      _
    %v18 = vld [vmem:[%s0] sm:$0xff]
    %v19 = vld [vmem:[%s1] sm:$0xff]
    %v20 = vld [vmem:[%s2] sm:$0xff]
    %v21 = vld [vmem:[%s3] sm:$0xff]
    %23 = vset.pattern.permute.xlu0 0
    %24 = vperm.xlu0 %23, %v20
    %v25 = vpop.permute.xlu0 %24
    %v27 = vrcp.pop %v25
    %v28 = vmul.f32 %v25, %v27
    %v29 = vsub.f32 1.0, %v28
    %v30 = vmul.f32 %v27, %v29
    %v31 = vadd.f32 %v27, %v30
    %vm32 = vweird.f32 %v25
    %vm33 = vweird.f32 %v27
    %vm34 = vmor %vm32, %vm33
    %v35 = vsel %vm34, %v27, %v31
    %v36 = vand.u32 2147483647, %v25
    %vm37 = vcmp.eq.f32.partialorder %v36, 8.507059e+37
    %v38 = vand.u32 %v25, 2147483648
    %v39 = vor.u32 1.1754944e-38, %v38
    %v40 = vsel %vm37, %v39, %v35
    %v41 = vmul.f32 %v18, %v40
    %v42 = vfloor.f32 %v41
    %vm43 = vcmp.ge.f32.partialorder %v19, 0.0
    %v44 = vsel %vm43, 1.0, 0.0
    %v45 = vadd.f32 %v42, %v44
    %47 = vset.pattern.permute.xlu0 0
    %48 = vperm.xlu0 %47, %v21
    %v49 = vpop.permute.xlu0 %48
    %v51 = vadd.f32 %v45, %v49
    %v52 = vmax.f32 %v51, 0.0
    %v53 = vmin.f32 %v52, 15.0
    %v54 = vsub.f32 %v53, %v49
    %v55 = vmul.f32 %v54, %v25
    %vm56 = vcmask 293888
    %57 = vst.msk [vmem:[#allocation2] sm:$0xff] %vm56, %v55
    // Predicated region
    $region18: #{tpu_custom_call.1} parent=1 // pred_check
      _
    $region19: #{tpu_custom_call.1} parent=1 // pred_check_branch
      %59 = sbr.rel (0) target = $region21
    $region20: #{tpu_custom_call.1} parent=1 // pred_region
      %61 = vsyncadd [#allocation3], 0
      %s63 = sshll.u32 [#allocation2], 4
      %s64 = int_to_ptr.vmem [resolvable:$true] %s63
      %s65 = sshll.u32 %s4, 4
      %s66 = int_to_ptr.hbm [resolvable:$true] %s65
      %68 = dma.vmem_to_hbm [thread:$0]  %s64, 128, %s66, [#allocation3]
    $region21: #{tpu_custom_call.1} parent=1 // pred_fallthru
      _
    // Predicated region
    $region22: #{tpu_custom_call.1} parent=1 // pred_check
      _
    $region23: #{tpu_custom_call.1} parent=1 // pred_check_branch
      %70 = sbr.rel (0) target = $region25
    $region24: #{tpu_custom_call.1} parent=1 // pred_region
      %72 = dma.done [#allocation3], 128
    $region25: #{tpu_custom_call.1} parent=1 // pred_fallthru
      _
    %73 = vsyncpa [#allocation3], 1

</llo_original>
